<compile_context>
chip_gen: v7x
topology: tpu7x:2x2x1
jax: 0.10.0
libtpu: 0.0.40
codegen_flags: <defaults>
</compile_context>

<pallas_src>
import functools

import jax
import jax.numpy as jnp
from jax.experimental import pallas as pl
from jax.experimental.pallas import tpu as pltpu

_LANE = 128
_MAX_TILE_ROWS = 1024          # (1, 1024, 128) f32 tile = 512 KiB -> ~2 MiB double-buffered


# ---------------------------------------------------------------------------
# Kernel: one grid step == (one batch sample, one feature tile).
# The per-sample scale (0.0 for dropped samples, 1/keep_prob for kept ones)
# lives in SMEM via scalar prefetch; the body is a single broadcast multiply.
# ---------------------------------------------------------------------------
def _drop_path_kernel(scale_ref, x_ref, o_ref):
    b = pl.program_id(0)
    scale = scale_ref[b]                                   # SMEM scalar read
    o_ref[...] = (x_ref[...] * scale).astype(o_ref.dtype)  # VPU broadcast mul, dense vst


# ---------------------------------------------------------------------------
# Wrapper: matches torch drop_path(x, drop_prob, training).
# ---------------------------------------------------------------------------
def drop_path(x, drop_prob: float = 0.0, *, training: bool = False, key=None):
    if drop_prob == 0.0 or not training:
        # Reference returns the input unchanged -> zero kernel launches.
        return x

    keep_prob = 1.0 - drop_prob
    if key is None:
        key = jax.random.PRNGKey(0)

    orig_shape = x.shape
    b = orig_shape[0]
    m = 1
    for d in orig_shape[1:]:
        m *= d

    # Per-sample keep decision, identical semantics to torch:
    #   mask = floor(keep_prob + U[0,1))  in {0, 1};  scale = mask / keep_prob
    u = jax.random.uniform(key, (b,), jnp.float32)
    scale = jnp.floor(jnp.float32(keep_prob) + u) * jnp.float32(1.0 / keep_prob)

    # Lane-dense layout: flatten non-batch dims into (B, N, 128).  When m is a
    # multiple of 128 (typical embed dims) this is a free contiguous reshape —
    # no extra HBM pass.  Only a ragged tail gets padded.
    m_pad = ((m + _LANE - 1) // _LANE) * _LANE
    xf = x.reshape(b, m)
    if m_pad != m:
        # TODO(synk): ragged tail could be handled with a masked residual tile
        # in-kernel instead of a pad + slice round-trip.
        xf = jnp.pad(xf, ((0, 0), (0, m_pad - m)))
    n = m_pad // _LANE
    x3 = xf.reshape(b, n, _LANE)

    # Feature-dim tiling: full extent if small, otherwise fixed 1024-row tiles
    # (multiple of 8 sublanes; ~0.5 MiB f32) so VMEM usage is bounded on all
    # generations (v7x's 64 MiB VMEM included) regardless of sample size.
    tile_n = n if n <= _MAX_TILE_ROWS else _MAX_TILE_ROWS
    n_tiles = pl.cdiv(n, tile_n)

    itemsize = jnp.dtype(x3.dtype).itemsize
    out = pl.pallas_call(
        _drop_path_kernel,
        out_shape=jax.ShapeDtypeStruct(x3.shape, x3.dtype),
        grid_spec=pltpu.PrefetchScalarGridSpec(
            num_scalar_prefetch=1,                               # (B,) scale in SMEM
            grid=(b, n_tiles),                                   # (sample, feature tile)
            in_specs=[pl.BlockSpec((1, tile_n, _LANE),
                                   lambda bi, ti, scale: (bi, ti, 0))],
            out_specs=pl.BlockSpec((1, tile_n, _LANE),
                                   lambda bi, ti, scale: (bi, ti, 0)),
        ),
        compiler_params=pltpu.CompilerParams(
            dimension_semantics=("parallel", "parallel")),        # megacore-friendly
        cost_estimate=pl.CostEstimate(
            flops=x3.size,
            transcendentals=0,
            bytes_accessed=2 * x3.size * itemsize),
    )(scale, x3)

    out = out.reshape(b, m_pad)
    if m_pad != m:
        out = out[:, :m]
    return out.reshape(orig_shape)


class DropPath:
    """Functional stand-in for the PyTorch DropPath module."""

    def __init__(self, drop_prob=None):
        self.drop_prob = float(drop_prob) if drop_prob is not None else 0.0

    def __call__(self, x, *, training: bool = False, key=None):
        return drop_path(x, self.drop_prob, training=training, key=key)


# ---------------------------------------------------------------------------
if __name__ == "__main__":
    key = jax.random.PRNGKey(0)
    kx, kd = jax.random.split(key)

    # Small CCT-like input: (batch, channels, H, W); flattened feature size is
    # 4*16*16 = 1024, a multiple of 128, so no padding round-trip is needed.
    B = 2
    x = jax.random.normal(kx, (B, 4, 16, 16), jnp.float32)

    # Eval mode / drop_prob == 0: exact identity, no kernel launch (as in PyTorch).
    y_eval = DropPath(0.25)(x, training=False)
    assert bool(jnp.all(y_eval == x))

    # Training mode: per-sample stochastic depth through the Pallas kernel.
    drop_prob = 0.25
    keep_prob = 1.0 - drop_prob
    fwd = jax.jit(functools.partial(drop_path, drop_prob=drop_prob, training=True))
    y = fwd(x, key=kd)
    jax.block_until_ready(y)

    assert y.shape == x.shape
    assert bool(jnp.all(jnp.isfinite(y)))
    # Each sample must be either entirely dropped (zeros) or exactly x / keep_prob.
    for bi in range(B):
        dropped = bool(jnp.all(y[bi] == 0.0))
        kept = bool(jnp.allclose(y[bi], x[bi] / keep_prob, rtol=1e-6, atol=1e-6))
        assert dropped or kept

    # TODO(synk): cannot bit-match torch.rand's RNG stream; the wrapper reproduces
    # the same per-sample Bernoulli(keep_prob) + 1/keep_prob rescale semantics with
    # jax.random and the kernel applies the per-sample scale.
    print("KERNEL_OK")
</pallas_src>

<mosaic_0001>
module attributes {stable_mosaic.version = 11 : i64} {
  func.func @_drop_path_kernel(%arg0: i32, %arg1: i32, %arg2: memref<2xf32, #tpu.memory_space<smem>>, %arg3: memref<1x8x128xf32, #tpu.memory_space<vmem>>, %arg4: memref<1x8x128xf32, #tpu.memory_space<vmem>>) attributes {dimension_semantics = [#tpu.dimension_semantics<parallel>, #tpu.dimension_semantics<parallel>], iteration_bounds = array<i64: 2, 1>, scalar_prefetch = 1 : i64, scratch_operands = 0 : i64, tpu.core_type = #tpu.core_type<tc>, window_params = [{transform_indices = @transform_0, window_bounds = array<i64: 1, 8, 128>}, {transform_indices = @transform_1, window_bounds = array<i64: 1, 8, 128>}]} {
    %0 = arith.index_cast %arg0 : i32 to index
    %1 = memref.load %arg2[%0] : memref<2xf32, #tpu.memory_space<smem>>
    %c0 = arith.constant 0 : index
    %c0_0 = arith.constant 0 : index
    %c0_1 = arith.constant 0 : index
    %2 = vector.load %arg3[%c0, %c0_0, %c0_1] : memref<1x8x128xf32, #tpu.memory_space<vmem>>, vector<1x8x128xf32>
    %3 = vector.broadcast %1 : f32 to vector<1x8x128xf32>
    %4 = arith.mulf %2, %3 : vector<1x8x128xf32>
    %c0_2 = arith.constant 0 : index
    %c0_3 = arith.constant 0 : index
    %c0_4 = arith.constant 0 : index
    %5 = vector.load %arg4[%c0_2, %c0_3, %c0_4] : memref<1x8x128xf32, #tpu.memory_space<vmem>>, vector<1x8x128xf32>
    tpu.vector_store %arg4[%c0_2, %c0_3, %c0_4], %4 {strides = array<i32>} : memref<1x8x128xf32, #tpu.memory_space<vmem>>, vector<1x8x128xf32>,
    return
  }
  func.func @transform_0(%arg0: i32, %arg1: i32, %arg2: memref<2xf32, #tpu.memory_space<smem>>) -> (i32, i32, i32) {
    %c0_i32 = arith.constant 0 : i32
    %c0_i32_0 = arith.constant 0 : i32
    return %arg0, %arg1, %c0_i32 : i32, i32, i32
  }
  func.func @transform_1(%arg0: i32, %arg1: i32, %arg2: memref<2xf32, #tpu.memory_space<smem>>) -> (i32, i32, i32) {
    %c0_i32 = arith.constant 0 : i32
    %c0_i32_0 = arith.constant 0 : i32
    return %arg0, %arg1, %c0_i32 : i32, i32, i32
  }
}

</mosaic_0001>

<llo_original>
// kernel: drop_path.1
$region0: #{drop_path.1}
  #allocation0 [shape = 'u32[]', space=smem, size = 0x4, offset = 0x4, fixed_abs, tag = 'smem constant byte address 0x4 - core index']
  #allocation1 [shape = 'u32[144,128]{1,0:T(1,128)}', space=vmem, size = 0x12000, scoped, tag = 'internal scratch']
  #allocation2 [shape = 's32[1]{0}', space=sflag, size = 0x4, scoped, tag = 'scoped memory for drop_path.1']
  #allocation3 [shape = 'u8[512]{0}', space=smem, size = 0x200, scoped, tag = 'prefetched SMEM operand 0']
  %s0 = inlined_call_operand.vmem [shape: f32[2], index: 0, kind: input, shape index: {}]
  %s1 = inlined_call_operand.vmem [shape: f32[2,8,128], index: 1, kind: input, shape index: {}]
  %s2 = inlined_call_operand.vmem [shape: f32[2,8,128], index: 2, kind: output, shape index: {}]
  %s3 = sld [smem:[#allocation0]]
  $region37: #{drop_path.1} parent=0
    _
  %s5 = ssub.s32 1, %s3
  %s6 = scalar_select 0, %s5, %s3
  %s7 = sshll.u32 %s0, 4
  %s8 = int_to_ptr.vmem [resolvable:$true] %s7
  %10 = dma.vmem_to_smem %s8, 16, [#allocation3], [#allocation2]
  %11 = dma.done [#allocation2], 16
  %12 = sfence
  loop: start=0, step=1, limit=4
  $region2: #{drop_path.1} parent=0 // loop_pre_header
    _
  $region3: #{drop_path.1} parent=0 // loop_header
    %s14 = sphi 0, %s18
    %p15 = scmp.ge.s32.totalorder %s14, 4
    %s21 = sphi 0, %s33
    %s22 = sphi 0, %s29
    %s23 = sphi 0, %s21
    %s24 = sphi 0, %s22
    %s25 = sphi 0, %s23
    %s26 = sphi 0, %s24
    %s38 = sphi 0, %s40
    %s41 = sphi 0, %s38
    %s42 = sphi 0, %s41
    %s58 = sphi 0, %s42
    %s66 = sphi 0, %s68
    %s69 = sphi 0, %s66
    %s70 = sphi 0, %s69
    %s86 = sphi 0, %s70
  $region4: #{drop_path.1} parent=0 // loop_header_branch
    %17 = sbr.rel (%p15) target = $region8
  $region5: #{drop_path.1} parent=0 // loop_body
    %s19 = ssub.s32 %s14, 1
    %s20 = ssub.s32 %s14, 2
    %s27 = sadd.s32 1, %s22
    %p28 = scmp.ge.s32.totalorder %s27, 1
    %s29 = scalar_select %p28, 0, %s27
    %s30 = sadd.s32 1, %s21
    %s31 = scalar_select %p28, %s30, %s21
    %p32 = scmp.ge.s32.totalorder %s31, 2
    %s33 = scalar_select %p32, 0, %s31
    %s34 = ssub.s32 %s21, %s33
    %s35 = ssub.s32 %s22, %s29
    %s36 = sor.u32 %s34, %s35
    %p37 = scmp.eq.s32.totalorder %s36, 0
    %s39 = sadd.s32 %s38, 1
    %s40 = scalar_select %p37, %s38, %s39
    %p43 = pneg %p37
    %p44 = scmp.eq.s32.totalorder %s14, 1
    %p45 = por %p43, %p44
    %p46 = scmp.ne.s32.totalorder %s38, %s41
    %p47 = scmp.eq.s32.totalorder %s14, 0
    %p48 = por %p46, %p47
    %p49 = scmp.ne.s32.totalorder %s38, %s41
    %p50 = scmp.eq.s32.totalorder %s19, 1
    %p51 = por %p49, %p50
    %p52 = scmp.ne.s32.totalorder %s41, %s42
    %p53 = scmp.eq.s32.totalorder %s19, 0
    %p54 = por %p52, %p53
    %p55 = scmp.ne.s32.totalorder %s41, %s42
    %p56 = scmp.eq.s32.totalorder %s20, 1
    %p57 = por %p55, %p56
    %p59 = scmp.ne.s32.totalorder %s42, %s58
    %p60 = scmp.eq.s32.totalorder %s20, 0
    %p61 = por %p59, %p60
    %s62 = ssub.s32 %s21, %s33
    %s63 = ssub.s32 %s22, %s29
    %s64 = sor.u32 %s62, %s63
    %p65 = scmp.eq.s32.totalorder %s64, 0
    %s67 = sadd.s32 %s66, 1
    %s68 = scalar_select %p65, %s66, %s67
    %p71 = pneg %p65
    %p72 = scmp.eq.s32.totalorder %s14, 1
    %p73 = por %p71, %p72
    %p74 = scmp.ne.s32.totalorder %s66, %s69
    %p75 = scmp.eq.s32.totalorder %s14, 0
    %p76 = por %p74, %p75
    %p77 = scmp.ne.s32.totalorder %s66, %s69
    %p78 = scmp.eq.s32.totalorder %s19, 1
    %p79 = por %p77, %p78
    %p80 = scmp.ne.s32.totalorder %s69, %s70
    %p81 = scmp.eq.s32.totalorder %s19, 0
    %p82 = por %p80, %p81
    %p83 = scmp.ne.s32.totalorder %s69, %s70
    %p84 = scmp.eq.s32.totalorder %s20, 1
    %p85 = por %p83, %p84
    %p87 = scmp.ne.s32.totalorder %s70, %s86
    %p88 = scmp.eq.s32.totalorder %s20, 0
    %p89 = por %p87, %p88
    %p90 = scmp.le.s32.totalorder 1, %s14
    %p91 = scmp.lt.s32.totalorder %s14, 3
    %p92 = pnand %p90, %p91
    %p93 = pneg %p92
    // Predicated region
    $region9: #{drop_path.1} parent=5 // pred_check
      _
    $region10: #{drop_path.1} parent=5 // pred_check_branch
      %95 = sbr.rel (%p92) target = $region12
    $region11: #{drop_path.1} parent=5 // pred_region
      %s96 = ssub.s32 %s14, 1
    $region12: #{drop_path.1} parent=5 // pred_fallthru
      _
    %p97 = scmp.lt.s32.totalorder %s14, 2
    // Predicated region
    $region13: #{drop_path.1} parent=5 // pred_check
      %p98 = pneg %p97
    $region14: #{drop_path.1} parent=5 // pred_check_branch
      %100 = sbr.rel (%p98) target = $region16
    $region15: #{drop_path.1} parent=5 // pred_region
      // Predicated region
      $region17: #{drop_path.1} parent=15 // pred_check
        %p101 = pneg %p48
      $region18: #{drop_path.1} parent=15 // pred_check_branch
        %103 = sbr.rel (%p101) target = $region20
      $region19: #{drop_path.1} parent=15 // pred_region
        %p104 = scmp.lt.s32.totalorder %s21, 1
        %s105 = scalar_select %p104, %s21, 1
        %p106 = scmp.lt.s32.totalorder %s22, 0
        %s107 = scalar_select %p106, %s22, 0
        %s108 = sadd.s32 %s107, %s105
        %s109 = smul.addr %s108, 8
        %s110 = scalar_lea.vmem %s1, %s109
      $region20: #{drop_path.1} parent=15 // pred_fallthru
        _
    $region16: #{drop_path.1} parent=5 // pred_fallthru
      _
    %p111 = scmp.le.s32.totalorder 1, %s14
    %p112 = scmp.lt.s32.totalorder %s14, 3
    %p113 = pnand %p111, %p112
    %p114 = pneg %p113
    // Predicated region
    $region21: #{drop_path.1} parent=5 // pred_check
      _
    $region22: #{drop_path.1} parent=5 // pred_check_branch
      %116 = sbr.rel (%p113) target = $region24
    $region23: #{drop_path.1} parent=5 // pred_region
      %s117 = ssub.s32 %s14, 1
      %p118 = scmp.lt.s32.totalorder %s23, 1
      %s119 = scalar_select %p118, %s23, 1
      %p120 = scmp.lt.s32.totalorder %s24, 0
      %s121 = scalar_select %p120, %s24, 0
      %s122 = sadd.s32 %s121, %s119
      %s123 = smul.addr %s122, 8
      %s124 = scalar_lea.vmem %s1, %s123
      %p125 = pneg %p54
      %p126 = pneg %p51
      %p127 = pneg %p82
      %p128 = pneg %p79
      %p129 = scmp.lt.s32.totalorder %s23, 1
      %s130 = scalar_select %p129, %s23, 1
      %p131 = scmp.lt.s32.totalorder %s24, 0
      %s132 = scalar_select %p131, %s24, 0
      %s133 = sadd.s32 %s132, %s130
      %s134 = smul.addr %s133, 8
      %s135 = scalar_lea.vmem %s2, %s134
      %p136 = scmp.lt.s32.totalorder %s23, 1
      %s137 = scalar_select %p136, %s23, 1
      %p138 = scmp.lt.s32.totalorder %s24, 0
      %s139 = scalar_select %p138, %s24, 0
      %s140 = sadd.s32 %s139, %s137
      %s141 = smul.addr %s140, 8
      %s142 = scalar_lea.vmem %s1, %s141
      %p143 = scmp.lt.s32.totalorder %s23, 1
      %s144 = scalar_select %p143, %s23, 1
      %p145 = scmp.lt.s32.totalorder %s24, 0
      %s146 = scalar_select %p145, %s24, 0
      %s147 = sadd.s32 %s146, %s144
      %s148 = smul.addr %s147, 8
      %s149 = scalar_lea.vmem %s2, %s148
      %s150 = sld [smem:[#allocation3 + %s23]]
      %v151 = vld [vmem:[%s142] sm:$0xff]
      %v152 = vstv %s150
      %v153 = vmul.f32 %v151, %v152
      %154 = vst [vmem:[%s149] sm:$0xff] %v153
      %p155 = scmp.lt.s32.totalorder %s23, 1
      %s156 = scalar_select %p155, %s23, 1
      %p157 = scmp.lt.s32.totalorder %s24, 0
      %s158 = scalar_select %p157, %s24, 0
      %s159 = sadd.s32 %s158, %s156
      %s160 = smul.addr %s159, 8
      %s161 = scalar_lea.vmem %s2, %s160
      // Predicated region
      $region25: #{drop_path.1} parent=23 // pred_check
        %p162 = pneg %p79
      $region26: #{drop_path.1} parent=23 // pred_check_branch
        %164 = sbr.rel (%p162) target = $region28
      $region27: #{drop_path.1} parent=23 // pred_region
        _
      $region28: #{drop_path.1} parent=23 // pred_fallthru
        _
    $region24: #{drop_path.1} parent=5 // pred_fallthru
      _
    %p165 = scmp.le.s32.totalorder 2, %s14
    // Predicated region
    $region29: #{drop_path.1} parent=5 // pred_check
      %p166 = pneg %p165
    $region30: #{drop_path.1} parent=5 // pred_check_branch
      %168 = sbr.rel (%p166) target = $region32
    $region31: #{drop_path.1} parent=5 // pred_region
      %s169 = ssub.s32 %s14, 2
      // Predicated region
      $region33: #{drop_path.1} parent=31 // pred_check
        %p170 = pneg %p85
      $region34: #{drop_path.1} parent=31 // pred_check_branch
        %172 = sbr.rel (%p170) target = $region36
      $region35: #{drop_path.1} parent=31 // pred_region
        %p173 = scmp.lt.s32.totalorder %s25, 1
        %s174 = scalar_select %p173, %s25, 1
        %p175 = scmp.lt.s32.totalorder %s26, 0
        %s176 = scalar_select %p175, %s26, 0
        %s177 = sadd.s32 %s176, %s174
        %s178 = smul.addr %s177, 8
        %s179 = scalar_lea.vmem %s2, %s178
      $region36: #{drop_path.1} parent=31 // pred_fallthru
        _
    $region32: #{drop_path.1} parent=5 // pred_fallthru
      _
  $region6: #{drop_path.1} parent=0 // loop_footer
    %s18 = sadd.s32 1, %s14
  $region7: #{drop_path.1} parent=0 // loop_footer_branch
    %13 = sbr.rel target = $region3
  $region8: #{drop_path.1} parent=0 // loop_exit
    _

</llo_original>
